<compile_context>
chip_gen: v6e
topology: v6e:2x2x1
jax: 0.10.0
libtpu: 0.0.40
codegen_flags: <defaults>
</compile_context>

<pallas_src>
import functools

import jax
import jax.numpy as jnp
from jax.experimental import pallas as pl
from jax.experimental.pallas import tpu as pltpu


def _hardsigmoid(v):
    # PyTorch F.hardsigmoid: relu6(x + 3) / 6 == clip(x/6 + 0.5, 0, 1)
    return jnp.clip(v * (1.0 / 6.0) + 0.5, 0.0, 1.0)


def _meta_aconc_kernel(x_ref, prm_ref, o_ref, *, rows):
    """Fused MetaAconC on one row block.

    x_ref  : (R, HW)      R = g*C rows (whole samples), HW on the lane axis.
    prm_ref: (R, R + 8)   packed params (f32):
             lanes [0, R)   block-diag(A,...,A) with A = fc2.w @ fc1.w  (fused 1x1 convs)
             lane  R + 0    fused bias (fc2.w @ fc1.b + fc2.b)[c]
             lane  R + 1    p1[c]
             lane  R + 2    p2[c]
             lanes R+3..R+7 zero pad (keeps the scalar group 8-lane aligned)
    """
    x = x_ref[...].astype(jnp.float32)                 # (R, HW) compute in f32
    prm = prm_ref[...]                                 # (R, R+8)

    wbig = prm[:, 0:rows]                              # (R, R)
    cvec = prm[:, rows + 0:rows + 1]                   # (R, 1)
    p1 = prm[:, rows + 1:rows + 2]                     # (R, 1)
    p2 = prm[:, rows + 2:rows + 3]                     # (R, 1)

    # Per-(n, c) spatial mean: single-pass f32 lane reduction (full HW is in the block).
    y = jnp.mean(x, axis=-1, keepdims=True)            # (R, 1)

    # beta = hardsigmoid(fc2(fc1(y))). Both 1x1 convs are linear, pre-fused in the wrapper
    # into a per-sample (C x C) map; in row layout that is one tiny block-diagonal matmul
    # (R <= 512), negligible next to the HBM-bound element-wise stream.
    z = jnp.dot(wbig, y, preferred_element_type=jnp.float32) + cvec   # (R, 1)
    beta = _hardsigmoid(z)                             # (R, 1)

    dpx = (p1 - p2) * x                                # (R, HW)
    o_ref[...] = (dpx * _hardsigmoid(beta * dpx) + p2 * x).astype(o_ref.dtype)


def _pick_samples_per_block(n, c, hw, itemsize, budget_bytes=2 << 20, max_rows=512):
    """Samples per block g: rows = g*c must be sublane-dense for the dtype (8/16/32), g | n,
    and the activation block should stay under ~2 MiB so in+out double-buffers fit every
    generation's scoped VMEM. Falls back to the whole batch in one block (always legal,
    since a full-extent block dim is exempt from the (8,128) divisibility rule)."""
    sub = 8 * max(1, 4 // itemsize)                    # 8 (f32) / 16 (bf16) / 32 (int8)
    g0 = next((g for g in range(1, n + 1) if (g * c) % sub == 0), None)
    if g0 is None or n % g0 != 0:
        return n
    g = g0
    cand = g0
    while cand <= n:
        if n % cand == 0 and cand * c * hw * itemsize <= budget_bytes and cand * c <= max_rows:
            g = cand
        cand += g0
    return g


def meta_aconc(x, p1, p2, w1, b1, w2, b2, *, donate_x=False):
    """MetaAconC forward.

    x  : (N, C, H, W)
    p1, p2 : (1, C, 1, 1)      learnable per-channel parameters
    w1 : (C2, C), b1 : (C2,)   fc1 (1x1 conv) weight / bias
    w2 : (C, C2), b2 : (C,)    fc2 (1x1 conv) weight / bias
    donate_x: alias the output onto x's HBM buffer (only if the caller no longer needs x).
    """
    N, C, H, W = x.shape
    HW = H * W
    f32 = jnp.float32

    # Fold fc2(fc1(.)) (both linear, no activation between) into one per-sample affine map.
    A = w2.astype(f32) @ w1.astype(f32)                            # (C, C)
    cvec = w2.astype(f32) @ b1.astype(f32) + b2.astype(f32)        # (C,)

    # Sublane-dense activation layout: rows = samples x channels.
    x2 = x.reshape(N * C, HW)
    itemsize = jnp.dtype(x.dtype).itemsize
    g = _pick_samples_per_block(N, C, HW, itemsize)
    R = g * C                                                      # rows per block
    n_blocks = (N * C) // R

    # Packed per-row params: one small lane-aligned block, constant index_map -> one DMA.
    wbig = jnp.kron(jnp.eye(g, dtype=f32), A)                      # (R, R) block-diagonal
    col = lambda v: jnp.tile(v.astype(f32).reshape(C), (g,))[:, None]   # (R, 1)
    params = jnp.concatenate(
        [wbig, col(cvec), col(p1), col(p2), jnp.zeros((R, 5), f32)], axis=1)   # (R, R+8)
    K = R + 8

    block_io_bytes = R * HW * itemsize
    vmem_limit = int(max(8 << 20, 4 * block_io_bytes + 2 * R * K * 4 + (2 << 20)))

    out = pl.pallas_call(
        functools.partial(_meta_aconc_kernel, rows=R),
        out_shape=jax.ShapeDtypeStruct((N * C, HW), x.dtype),
        grid_spec=pltpu.PrefetchScalarGridSpec(
            num_scalar_prefetch=0,
            grid=(n_blocks,),
            in_specs=[
                pl.BlockSpec((R, HW), lambda i: (i, 0)),   # activations (pipelined)
                pl.BlockSpec((R, K), lambda i: (0, 0)),    # packed params (fetched once)
            ],
            out_specs=pl.BlockSpec((R, HW), lambda i: (i, 0)),
        ),
        compiler_params=pltpu.CompilerParams(
            dimension_semantics=("parallel",),             # shards across TCs on v7x
            vmem_limit_bytes=vmem_limit,
        ),
        input_output_aliases=({0: 0} if donate_x else {}),
    )(x2, params)
    return out.reshape(N, C, H, W)


def meta_aconc_reference(x, p1, p2, w1, b1, w2, b2):
    """Pure-JAX reference mirroring the PyTorch forward (fc1 and fc2 applied separately)."""
    y = x.mean(axis=2, keepdims=True).mean(axis=3, keepdims=True)            # (N, C, 1, 1)
    z1 = jnp.einsum("nchw,oc->nohw", y, w1) + b1[None, :, None, None]        # fc1 (1x1 conv)
    z2 = jnp.einsum("nchw,oc->nohw", z1, w2) + b2[None, :, None, None]       # fc2 (1x1 conv)
    beta = _hardsigmoid(z2)
    dpx = (p1 - p2) * x
    return dpx * _hardsigmoid(beta * dpx) + p2 * x


if __name__ == "__main__":
    # Module config: c1=4 channels, k=1, s=1, r=16  ->  c2 = max(16, 4 // 16) = 16
    N, C1, H, W = 2, 4, 16, 16
    C2 = max(16, C1 // 16)

    key = jax.random.PRNGKey(0)
    k_x, k_p1, k_p2, k_w1, k_b1, k_w2, k_b2 = jax.random.split(key, 7)

    x = jax.random.normal(k_x, (N, C1, H, W), dtype=jnp.float32)
    p1 = jax.random.normal(k_p1, (1, C1, 1, 1), dtype=jnp.float32)
    p2 = jax.random.normal(k_p2, (1, C1, 1, 1), dtype=jnp.float32)
    w1 = jax.random.normal(k_w1, (C2, C1), dtype=jnp.float32) * 0.1   # fc1.weight (c2,c1,1,1) squeezed
    b1 = jax.random.normal(k_b1, (C2,), dtype=jnp.float32) * 0.1      # fc1.bias
    w2 = jax.random.normal(k_w2, (C1, C2), dtype=jnp.float32) * 0.1   # fc2.weight (c1,c2,1,1) squeezed
    b2 = jax.random.normal(k_b2, (C1,), dtype=jnp.float32) * 0.1      # fc2.bias

    # donate_x left False here because x is reused by the reference check below.
    out = jax.block_until_ready(meta_aconc(x, p1, p2, w1, b1, w2, b2, donate_x=False))
    ref = meta_aconc_reference(x, p1, p2, w1, b1, w2, b2)

    assert out.shape == (N, C1, H, W)
    assert jnp.max(jnp.abs(out - ref)) < 1e-5, "Pallas kernel mismatch vs reference"

    print("KERNEL_OK")
</pallas_src>

<mosaic_0001>
module attributes {stable_mosaic.version = 11 : i64} {
  func.func @_meta_aconc_kernel(%arg0: i32, %arg1: memref<8x256xf32, #tpu.memory_space<vmem>>, %arg2: memref<8x16xf32, #tpu.memory_space<vmem>>, %arg3: memref<8x256xf32, #tpu.memory_space<vmem>>) attributes {dimension_semantics = [#tpu.dimension_semantics<parallel>], iteration_bounds = array<i64: 1>, scalar_prefetch = 0 : i64, scratch_operands = 0 : i64, tpu.core_type = #tpu.core_type<tc>, window_params = [{transform_indices = @transform_0, window_bounds = array<i64: 8, 256>}, {pipeline_mode = #tpu.pipeline_mode<synchronous>, transform_indices = @transform_1, window_bounds = array<i64: 8, 16>}, {transform_indices = @transform_2, window_bounds = array<i64: 8, 256>}]} {
    %c0 = arith.constant 0 : index
    %c0_0 = arith.constant 0 : index
    %0 = vector.load %arg1[%c0, %c0_0] : memref<8x256xf32, #tpu.memory_space<vmem>>, vector<8x256xf32>
    %c0_1 = arith.constant 0 : index
    %c0_2 = arith.constant 0 : index
    %1 = vector.load %arg2[%c0_1, %c0_2] : memref<8x16xf32, #tpu.memory_space<vmem>>, vector<8x16xf32>
    %2 = vector.extract_strided_slice %1 {offsets = [0, 0], sizes = [8, 8], strides = [1, 1]} : vector<8x16xf32> to vector<8x8xf32>
    %3 = vector.extract_strided_slice %1 {offsets = [0, 8], sizes = [8, 1], strides = [1, 1]} : vector<8x16xf32> to vector<8x1xf32>
    %4 = vector.extract_strided_slice %1 {offsets = [0, 9], sizes = [8, 1], strides = [1, 1]} : vector<8x16xf32> to vector<8x1xf32>
    %5 = vector.extract_strided_slice %1 {offsets = [0, 10], sizes = [8, 1], strides = [1, 1]} : vector<8x16xf32> to vector<8x1xf32>
    %cst = arith.constant dense<0.000000e+00> : vector<8xf32>
    %6 = vector.multi_reduction <add>, %0, %cst [1] : vector<8x256xf32> to vector<8xf32>
    %7 = vector.shape_cast %6 : vector<8xf32> to vector<8x1xf32>
    %cst_3 = arith.constant 2.560000e+02 : f32
    %8 = vector.broadcast %cst_3 : f32 to vector<8x1xf32>
    %9 = arith.divf %7, %8 : vector<8x1xf32>
    %cst_4 = arith.constant dense<0.000000e+00> : vector<8x1xf32>
    %10 = tpu.matmul %2, %9, %cst_4 {dimension_numbers = #tpu.dot_dimension_numbers<[1], [0], [0], [1], [0, 0, 1, 1], [], []>} : vector<8x8xf32>, vector<8x1xf32>, vector<8x1xf32> -> vector<8x1xf32>
    %11 = arith.addf %10, %3 : vector<8x1xf32>
    %cst_5 = arith.constant 0.166666672 : f32
    %12 = vector.broadcast %cst_5 : f32 to vector<8x1xf32>
    %13 = arith.mulf %11, %12 : vector<8x1xf32>
    %cst_6 = arith.constant 5.000000e-01 : f32
    %14 = vector.broadcast %cst_6 : f32 to vector<8x1xf32>
    %15 = arith.addf %13, %14 : vector<8x1xf32>
    %cst_7 = arith.constant 0.000000e+00 : f32
    %cst_8 = arith.constant 1.000000e+00 : f32
    %16 = vector.broadcast %cst_7 : f32 to vector<8x1xf32>
    %17 = arith.maximumf %16, %15 : vector<8x1xf32>
    %18 = vector.broadcast %cst_8 : f32 to vector<8x1xf32>
    %19 = arith.minimumf %18, %17 : vector<8x1xf32>
    %20 = arith.subf %4, %5 : vector<8x1xf32>
    %21 = vector.broadcast %20 : vector<8x1xf32> to vector<8x256xf32>
    %22 = arith.mulf %21, %0 : vector<8x256xf32>
    %23 = vector.broadcast %19 : vector<8x1xf32> to vector<8x256xf32>
    %24 = arith.mulf %23, %22 : vector<8x256xf32>
    %cst_9 = arith.constant 0.166666672 : f32
    %25 = vector.broadcast %cst_9 : f32 to vector<8x256xf32>
    %26 = arith.mulf %24, %25 : vector<8x256xf32>
    %cst_10 = arith.constant 5.000000e-01 : f32
    %27 = vector.broadcast %cst_10 : f32 to vector<8x256xf32>
    %28 = arith.addf %26, %27 : vector<8x256xf32>
    %cst_11 = arith.constant 0.000000e+00 : f32
    %cst_12 = arith.constant 1.000000e+00 : f32
    %29 = vector.broadcast %cst_11 : f32 to vector<8x256xf32>
    %30 = arith.maximumf %29, %28 : vector<8x256xf32>
    %31 = vector.broadcast %cst_12 : f32 to vector<8x256xf32>
    %32 = arith.minimumf %31, %30 : vector<8x256xf32>
    %33 = arith.mulf %22, %32 : vector<8x256xf32>
    %34 = vector.broadcast %5 : vector<8x1xf32> to vector<8x256xf32>
    %35 = arith.mulf %34, %0 : vector<8x256xf32>
    %36 = arith.addf %33, %35 : vector<8x256xf32>
    %c0_13 = arith.constant 0 : index
    %c0_14 = arith.constant 0 : index
    %37 = vector.load %arg3[%c0_13, %c0_14] : memref<8x256xf32, #tpu.memory_space<vmem>>, vector<8x256xf32>
    tpu.vector_store %arg3[%c0_13, %c0_14], %36 {strides = array<i32>} : memref<8x256xf32, #tpu.memory_space<vmem>>, vector<8x256xf32>,
    return
  }
  func.func @transform_0(%arg0: i32) -> (i32, i32) {
    %c0_i32 = arith.constant 0 : i32
    %c0_i32_0 = arith.constant 0 : i32
    return %arg0, %c0_i32 : i32, i32
  }
  func.func @transform_1(%arg0: i32) -> (i32, i32) {
    %c0_i32 = arith.constant 0 : i32
    %c0_i32_0 = arith.constant 0 : i32
    %c0_i32_1 = arith.constant 0 : i32
    return %c0_i32, %c0_i32_0 : i32, i32
  }
  func.func @transform_2(%arg0: i32) -> (i32, i32) {
    %c0_i32 = arith.constant 0 : i32
    %c0_i32_0 = arith.constant 0 : i32
    return %arg0, %c0_i32 : i32, i32
  }
}

</mosaic_0001>

<llo_original>
// kernel: tpu_custom_call.1
$region0: #{tpu_custom_call.1}
  #allocation0 [shape = 'u32[]', space=smem, size = 0x4, offset = 0x4, fixed_abs, tag = 'smem constant byte address 0x4 - core index']
  #allocation1 [shape = 'u32[144,128]{1,0:T(1,128)}', space=vmem, size = 0x12000, scoped, tag = 'internal scratch']
  %s0 = inlined_call_operand.hbm [shape: f32[8,256], index: 0, kind: input, shape index: {}]
  %s1 = inlined_call_operand.hbm [shape: f32[8,16], index: 1, kind: input, shape index: {}]
  %s2 = inlined_call_operand.hbm [shape: f32[8,256], index: 2, kind: output, shape index: {}]
  %s3 = sld [smem:[#allocation0]]
  $region26: #{tpu_custom_call.1} parent=0
    _
  %s5 = ssub.s32 1, %s3
  %s6 = scalar_select 0, %s5, %s3
  $region1: #{tpu_custom_call.1} parent=0
    #allocation2 [shape = 'u8[8192]{0}', space=vmem, size = 0x2000, scoped, tag = 'input window, operand 0, single buffered']
    #allocation3 [shape = 's32[1]{0}', space=sflag, size = 0x4, scoped, tag = 'scoped memory for tpu_custom_call.1']
    #allocation4 [shape = 's32[1]{0}', space=sflag, size = 0x4, scoped, tag = 'scoped memory for tpu_custom_call.1']
    #allocation5 [shape = 'u8[4096]{0}', space=vmem, size = 0x1000, scoped, tag = 'input window, operand 1, single buffered']
    #allocation6 [shape = 's32[1]{0}', space=sflag, size = 0x4, scoped, tag = 'scoped memory for tpu_custom_call.1']
    #allocation7 [shape = 'u8[8192]{0}', space=vmem, size = 0x2000, scoped, tag = 'output window, operand 0, single buffered']
    %7 = vsyncpa [#allocation3], 0
    %8 = vsyncpa [#allocation6], 0
    %9 = vsyncpa [#allocation4], 0
    // Predicated region
    $region2: #{tpu_custom_call.1} parent=1 // pred_check
      _
    $region3: #{tpu_custom_call.1} parent=1 // pred_check_branch
      %11 = sbr.rel (0) target = $region5
    $region4: #{tpu_custom_call.1} parent=1 // pred_region
      %s13 = ssub.s32 256, 256
      %14 = vsyncadd [#allocation3], %s13
      %s16 = sshll.u32 [#allocation2], 4
      %s17 = int_to_ptr.vmem [resolvable:$true] %s16
      %19 = dma.hbm_to_vmem [thread:$0]  %s0, 256, %s17, [#allocation3]
    $region5: #{tpu_custom_call.1} parent=1 // pred_fallthru
      _
    // Predicated region
    $region6: #{tpu_custom_call.1} parent=1 // pred_check
      _
    $region7: #{tpu_custom_call.1} parent=1 // pred_check_branch
      %21 = sbr.rel (0) target = $region9
    $region8: #{tpu_custom_call.1} parent=1 // pred_region
      %s23 = ssub.s32 128, 128
      %24 = vsyncadd [#allocation6], %s23
      %s26 = sshll.u32 [#allocation5], 4
      %s27 = int_to_ptr.vmem [resolvable:$true] %s26
      %29 = dma.hbm_to_vmem [thread:$0]  %s1, 128, %s27, [#allocation6]
    $region9: #{tpu_custom_call.1} parent=1 // pred_fallthru
      _
    // Predicated region
    $region10: #{tpu_custom_call.1} parent=1 // pred_check
      _
    $region11: #{tpu_custom_call.1} parent=1 // pred_check_branch
      %31 = sbr.rel (0) target = $region13
    $region12: #{tpu_custom_call.1} parent=1 // pred_region
      %32 = dma.done [#allocation3], 256
    $region13: #{tpu_custom_call.1} parent=1 // pred_fallthru
      _
    // Predicated region
    $region14: #{tpu_custom_call.1} parent=1 // pred_check
      _
    $region15: #{tpu_custom_call.1} parent=1 // pred_check_branch
      %34 = sbr.rel (0) target = $region17
    $region16: #{tpu_custom_call.1} parent=1 // pred_region
      %35 = dma.done [#allocation6], 128
    $region17: #{tpu_custom_call.1} parent=1 // pred_fallthru
      _
    %v36 = vld [vmem:[#allocation2] sm:$0xff]
    %v37 = vld [vmem:[#allocation2 + $0x8] sm:$0xff]
    %v38 = vld [vmem:[#allocation5] sm:$0xff]
    %v39 = vadd.f32 %v36, %v37
    %40 = vadd.xlane.f32.xlu0 %v39
    %v41 = vpop.xlane.xlu0 %40
    %v42 = vrcp.pop 256.0
    %v43 = vmul.f32 %v41, %v42
    %45 = vrot.lane.b32.xlu0 %v38, 120
    %v46 = vpop.permute.xlu0 %45
    %vm48 = vcmask 64512
    %v49 = vsel %vm48, %v38, 0
    %51 = vmatprep.subr.mxu0 0.0
    %52 = vmatpush1.msra.mxu0 0.0
    %53 = vmatprep.subr.mxu0 0.0
    %54 = vmatpush1.msra.mxu0 0.0
    %55 = vmatprep.subr.mxu0 0.0
    %56 = vmatpush1.msra.mxu0 0.0
    %57 = vmatprep.subr.mxu0 0.0
    %58 = vmatpush1.msra.mxu0 0.0
    %59 = vmatprep.subr.mxu0 0.0
    %60 = vmatpush1.msra.mxu0 0.0
    %61 = vmatprep.subr.mxu0 0.0
    %62 = vmatpush1.msra.mxu0 0.0
    %63 = vmatprep.subr.mxu0 0.0
    %64 = vmatpush1.msra.mxu0 0.0
    %65 = vmatprep.subr.mxu0 0.0
    %66 = vmatpush1.msra.mxu0 0.0
    %67 = vmatprep.subr.mxu0 0.0
    %68 = vmatpush1.msra.mxu0 0.0
    %69 = vmatprep.subr.mxu0 0.0
    %70 = vmatpush1.msra.mxu0 0.0
    %71 = vmatprep.subr.mxu0 0.0
    %72 = vmatpush1.msra.mxu0 0.0
    %73 = vmatprep.subr.mxu0 0.0
    %74 = vmatpush1.msra.mxu0 0.0
    %75 = vmatprep.subr.mxu0 0.0
    %76 = vmatpush1.msra.mxu0 0.0
    %77 = vmatprep.subr.mxu0 0.0
    %78 = vmatpush1.msra.mxu0 0.0
    %79 = vmatprep.subr.mxu0 0.0
    %80 = vmatpush1.msra.mxu0 0.0
    %81 = vmatprep.subr.mxu0 0.0
    %82 = vmatpush1.msra.mxu0 %v43
    %83 = vmatprep.subr.mxu0 0.0
    %84 = vmatpush2.msra.mxu0 0.0
    %85 = vmatprep.subr.mxu0 0.0
    %86 = vmatpush2.msra.mxu0 0.0
    %87 = vmatprep.subr.mxu0 0.0
    %88 = vmatpush2.msra.mxu0 0.0
    %89 = vmatprep.subr.mxu0 0.0
    %90 = vmatpush2.msra.mxu0 0.0
    %91 = vmatprep.subr.mxu0 0.0
    %92 = vmatpush2.msra.mxu0 0.0
    %93 = vmatprep.subr.mxu0 0.0
    %94 = vmatpush2.msra.mxu0 0.0
    %95 = vmatprep.subr.mxu0 0.0
    %96 = vmatpush2.msra.mxu0 0.0
    %97 = vmatprep.subr.mxu0 0.0
    %98 = vmatpush2.msra.mxu0 0.0
    %99 = vmatprep.subr.mxu0 0.0
    %100 = vmatpush2.msra.mxu0 0.0
    %101 = vmatprep.subr.mxu0 0.0
    %102 = vmatpush2.msra.mxu0 0.0
    %103 = vmatprep.subr.mxu0 0.0
    %104 = vmatpush2.msra.mxu0 0.0
    %105 = vmatprep.subr.mxu0 0.0
    %106 = vmatpush2.msra.mxu0 0.0
    %107 = vmatprep.subr.mxu0 0.0
    %108 = vmatpush2.msra.mxu0 0.0
    %109 = vmatprep.subr.mxu0 0.0
    %110 = vmatpush2.msra.mxu0 0.0
    %111 = vmatprep.subr.mxu0 0.0
    %112 = vmatpush2.msra.mxu0 0.0
    %113 = vmatprep.subr.mxu0 0.0
    %114 = vmatpush2.msra.mxu0 0.0
    %115 = vmatprep.mubr.f32.mxu0 0.0
    %116 = vmatmul.mubr.f32.gmra.mxu0 %v49
    %v117 = vpop.f32.mrf.mxu0
    %v118 = vadd.f32 %v46, %v117
    %v119 = vpop.f32.mrf.mxu0
    %120 = vdwg.mxu0
    %v121 = vmul.f32 %v118, 0.16666667
    %v122 = vadd.f32 %v121, 0.5
    %v123 = vmax.f32 %v122, 0.0
    %v124 = vmin.f32 %v123, 1.0
    %125 = vrot.lane.b32.xlu0 %v38, 127
    %v126 = vpop.permute.xlu0 %125
    %v128 = vsub.f32 %v38, %v126
    %130 = vset.pattern.permute.xlu0 9
    %131 = vperm.xlu0 %130, %v128
    %v132 = vpop.permute.xlu0 %131
    %v134 = vmul.f32 %v132, %v36
    %v135 = vmul.f32 %v132, %v37
    %137 = vset.pattern.permute.xlu0 0
    %138 = vperm.xlu0 %137, %v124
    %v139 = vpop.permute.xlu0 %138
    %v141 = vmul.f32 %v139, %v134
    %v142 = vmul.f32 %v139, %v135
    %v143 = vmul.f32 %v141, 0.16666667
    %v144 = vmul.f32 %v142, 0.16666667
    %v145 = vadd.f32 %v143, 0.5
    %v146 = vadd.f32 %v144, 0.5
    %v147 = vmax.f32 %v145, 0.0
    %v148 = vmax.f32 %v146, 0.0
    %v149 = vmin.f32 %v147, 1.0
    %v150 = vmin.f32 %v148, 1.0
    %v151 = vmul.f32 %v134, %v149
    %v152 = vmul.f32 %v135, %v150
    %153 = vset.pattern.permute.xlu0 10
    %154 = vperm.xlu0 %153, %v38
    %v155 = vpop.permute.xlu0 %154
    %v157 = vmul.f32 %v155, %v36
    %v158 = vmul.f32 %v155, %v37
    %v159 = vadd.f32 %v151, %v157
    %v160 = vadd.f32 %v152, %v158
    %161 = vst [vmem:[#allocation7] sm:$0xff] %v159
    %162 = vst [vmem:[#allocation7 + $0x8] sm:$0xff] %v160
    // Predicated region
    $region18: #{tpu_custom_call.1} parent=1 // pred_check
      _
    $region19: #{tpu_custom_call.1} parent=1 // pred_check_branch
      %164 = sbr.rel (0) target = $region21
    $region20: #{tpu_custom_call.1} parent=1 // pred_region
      %s166 = ssub.s32 256, 256
      %167 = vsyncadd [#allocation4], %s166
      %s169 = sshll.u32 [#allocation7], 4
      %s170 = int_to_ptr.vmem [resolvable:$true] %s169
      %172 = dma.vmem_to_hbm [thread:$0]  %s170, 256, %s2, [#allocation4]
    $region21: #{tpu_custom_call.1} parent=1 // pred_fallthru
      _
    // Predicated region
    $region22: #{tpu_custom_call.1} parent=1 // pred_check
      _
    $region23: #{tpu_custom_call.1} parent=1 // pred_check_branch
      %174 = sbr.rel (0) target = $region25
    $region24: #{tpu_custom_call.1} parent=1 // pred_region
      %175 = dma.done [#allocation4], 256
    $region25: #{tpu_custom_call.1} parent=1 // pred_fallthru
      _
    %176 = vsyncpa [#allocation3], 1
    %177 = vsyncpa [#allocation6], 1
    %178 = vsyncpa [#allocation4], 1

</llo_original>
